<compile_context>
chip_gen: v7x
topology: tpu7x:2x2x1
jax: 0.10.0
libtpu: 0.0.40
codegen_flags: <defaults>
</compile_context>

<pallas_src>
import functools
import math

import jax
import jax.numpy as jnp
from jax.experimental import pallas as pl
from jax.experimental.pallas import tpu as pltpu


# ----------------------------------------------------------------------------
# Fused forward kernel (one launch per forward)
# ----------------------------------------------------------------------------
def _teacher_fused_kernel(*refs, n_student_layers, n_teacher_layers,
                          ens_idx, rel_idx, t_rel_idx,
                          hidden_dim, t_hidden, out_dim, slab_width):
    it = iter(refs)
    x_ref = next(it)                                    # (tile_n, in_dim) f32
    w0_ref = next(it)                                   # (in_dim, 2H) f32  (norm folded)
    b0_ref = next(it)                                   # (1, 2H) f32
    sw = [next(it) for _ in range(n_student_layers - 1)]  # packed bf16 weights, layers 1..
    sb = [next(it) for _ in range(n_student_layers - 1)]  # packed f32 biases,  layers 1..
    tw = [next(it) for _ in range(n_teacher_layers)]       # teacher bf16 (W0 pre-folded)
    tb = [next(it) for _ in range(n_teacher_layers)]       # teacher f32 biases
    slab_ref = next(it)                                 # (tile_n, slab_width) f32

    f32, bf16 = jnp.float32, jnp.bfloat16
    off_rel = 2
    off_trel = off_rel + hidden_dim
    off_out = off_trel + t_hidden

    # Deterministic output (pad lanes included); one dense unmasked store.
    slab_ref[...] = jnp.zeros_like(slab_ref)

    x = x_ref[...].astype(f32)
    in_dim = x_ref.shape[1]

    # ---- packed-student layer 0 ----
    # K = in_dim (typically 2) -> broadcast FMAs on the VPU, skip the MXU.
    # lb/ub normalisation is already folded into w0_eff / b0_eff.
    w0 = w0_ref[...]
    acc = b0_ref[...] + x[:, 0:1] * w0[0:1, :]
    for k in range(1, in_dim):
        acc = acc + x[:, k:k + 1] * w0[k:k + 1, :]
    a = jnp.tanh(acc)

    if rel_idx == 0:                                    # static check (trace-time)
        slab_ref[:, off_rel:off_rel + hidden_dim] = a[:, :hidden_dim]
    ens = a if ens_idx == 0 else None

    # ---- remaining student hidden layers (block-diagonal packed, bf16 MXU) ----
    for li in range(1, n_student_layers - 1):
        a = jnp.tanh(jnp.dot(a.astype(bf16), sw[li - 1][...],
                             preferred_element_type=f32) + sb[li - 1][...])
        if li == rel_idx:
            slab_ref[:, off_rel:off_rel + hidden_dim] = a[:, :hidden_dim]
        if li == ens_idx:
            ens = a

    # Final student layer (block-diagonal) -> column 0 = NN pred, column 1 = M_NN pred.
    preds = (jnp.dot(a.astype(bf16), sw[-1][...], preferred_element_type=f32)
             + sb[-1][...])
    slab_ref[:, 0:2] = preds

    # ---- teacher MLP ----
    # The 2H->H ensemble sum AND the attention scaling are pre-folded into tw[0],
    # so the teacher consumes the packed (tile_n, 2H) ensemble activation directly.
    t = ens
    for li in range(n_teacher_layers - 1):
        t = jnp.tanh(jnp.dot(t.astype(bf16), tw[li][...],
                             preferred_element_type=f32) + tb[li][...])
        if li - 1 == t_rel_idx:                         # middle features start at li == 1
            slab_ref[:, off_trel:off_trel + t_hidden] = t
    out = (jnp.dot(t.astype(bf16), tw[-1][...], preferred_element_type=f32)
           + tb[-1][...])
    slab_ref[:, off_out:off_out + out_dim] = out


# ----------------------------------------------------------------------------
# Host wrapper: pack/fold weights, launch the single fused kernel
# ----------------------------------------------------------------------------
def _block_diag(a, b):
    top = jnp.concatenate([a, jnp.zeros((a.shape[0], b.shape[1]), a.dtype)], axis=1)
    bot = jnp.concatenate([jnp.zeros((b.shape[0], a.shape[1]), b.dtype), b], axis=1)
    return jnp.concatenate([top, bot], axis=0)


def _choose_tile_n(n):
    cap = 1024                       # x tile + output slab, double-buffered ~ 2 MiB
    if n <= 256:
        return n                     # single tile (block == full array)
    if n <= 2 * cap:
        # Two balanced tiles so the "parallel" batch axis can be split across
        # v7x's two TensorCores; rounded to the 8-row sublane granule.
        return min(cap, (((n + 1) // 2) + 7) // 8 * 8)
    return cap


def teacher_forward(params, x_u_train, *, lb, ub,
                    student_ensemble_layer_num, student_relation_layer_num,
                    teacher_relation_layer_num, atten_option):
    f32, bf16 = jnp.float32, jnp.bfloat16
    x = x_u_train.astype(f32)
    n, in_dim = x.shape

    nn_W, nn_b = params["model_NN"]["W"], params["model_NN"]["b"]
    mn_W, mn_b = params["model_M_NN"]["W"], params["model_M_NN"]["b"]
    t_W, t_b = params["teacher"]["W"], params["teacher"]["b"]

    n_s = len(nn_W)
    n_t = len(t_W)
    hidden_dim = nn_W[-1].shape[0]      # student hidden width
    t_hidden = t_W[-1].shape[0]         # teacher hidden width
    out_dim = t_W[-1].shape[1]
    assert t_W[0].shape[0] == hidden_dim, "teacher in_dim must equal student hidden width"

    # --- fold lb/ub normalisation into the packed first student layer ---
    lb2 = jnp.asarray(lb, f32).reshape(1, in_dim)
    ub2 = jnp.asarray(ub, f32).reshape(1, in_dim)
    inv = 2.0 / (ub2 - lb2)
    sw0 = jnp.concatenate([nn_W[0], mn_W[0]], axis=1).astype(f32)     # (in_dim, 2H)
    sb0 = jnp.concatenate([nn_b[0], mn_b[0]], axis=1).astype(f32)     # (1, 2H)
    w0_eff = inv.reshape(in_dim, 1) * sw0                             # x @ diag(inv) @ W0
    b0_eff = (-(lb2 * inv) - 1.0) @ sw0 + sb0

    # --- pack the two students side-by-side (block-diagonal), bf16 for the MXU ---
    sw, sb = [], []
    for i in range(1, n_s):
        sw.append(_block_diag(nn_W[i], mn_W[i]).astype(bf16))
        sb.append(jnp.concatenate([nn_b[i], mn_b[i]], axis=1).astype(f32))

    # --- teacher: fold 2H->H ensemble sum and the attention combine into W0 ---
    tw0 = jnp.concatenate([t_W[0], t_W[0]], axis=0).astype(f32)       # (2H, TH)
    if atten_option:
        aw = params["atten_w"].reshape(1, hidden_dim).astype(f32)
        aw_col = jnp.concatenate([aw, 1.0 - aw], axis=1).reshape(2 * hidden_dim, 1)
        tw0 = aw_col * tw0                                            # (h⊙aw)@W ≡ h@(diag(aw)W)
    tw = [tw0.astype(bf16)] + [w.astype(bf16) for w in t_W[1:]]
    tb = [b.astype(f32) for b in t_b]

    # --- static feature indices (torch negative list indexing == Python modulo) ---
    n_hidden_s = n_s - 1
    n_middle_t = n_t - 2
    assert -n_hidden_s <= student_ensemble_layer_num < n_hidden_s
    assert -n_hidden_s <= student_relation_layer_num < n_hidden_s
    assert -n_middle_t <= teacher_relation_layer_num < n_middle_t
    ens_idx = student_ensemble_layer_num % n_hidden_s
    rel_idx = student_relation_layer_num % n_hidden_s
    t_rel_idx = teacher_relation_layer_num % n_middle_t

    # --- lane-dense output slab layout ---
    off_rel = 2
    off_trel = off_rel + hidden_dim
    off_out = off_trel + t_hidden
    used = off_out + out_dim
    slab_width = ((used + 127) // 128) * 128

    # --- single pallas_call; grid only tiles the batch axis ---
    tile_n = _choose_tile_n(n)
    grid = (pl.cdiv(n, tile_n),)
    const = lambda i: (0, 0)          # grid-invariant -> weights stay VMEM-resident
    batch = lambda i: (i, 0)

    in_specs = (
        [pl.BlockSpec((tile_n, in_dim), batch),
         pl.BlockSpec(w0_eff.shape, const),
         pl.BlockSpec(b0_eff.shape, const)]
        + [pl.BlockSpec(w.shape, const) for w in sw]
        + [pl.BlockSpec(b.shape, const) for b in sb]
        + [pl.BlockSpec(w.shape, const) for w in tw]
        + [pl.BlockSpec(b.shape, const) for b in tb]
    )
    out_specs = pl.BlockSpec((tile_n, slab_width), batch)
    out_shape = jax.ShapeDtypeStruct((n, slab_width), f32)

    # Advisory cost estimate so XLA schedules the small custom call sensibly.
    flops = 2 * n * in_dim * (2 * hidden_dim)
    for w in sw:
        flops += 2 * n * w.shape[0] * w.shape[1]
    for w in tw:
        flops += 2 * n * w.shape[0] * w.shape[1]
    transcendentals = n * ((n_s - 1) * 2 * hidden_dim
                           + sum(w.shape[1] for w in tw[:-1]))
    bytes_accessed = (4 * x.size + 4 * (w0_eff.size + b0_eff.size)
                      + 2 * sum(w.size for w in sw + tw)
                      + 4 * sum(b.size for b in sb + tb)
                      + 4 * n * slab_width)
    cost = pl.CostEstimate(flops=int(flops),
                           transcendentals=int(transcendentals),
                           bytes_accessed=int(bytes_accessed))

    kernel = functools.partial(
        _teacher_fused_kernel,
        n_student_layers=n_s, n_teacher_layers=n_t,
        ens_idx=ens_idx, rel_idx=rel_idx, t_rel_idx=t_rel_idx,
        hidden_dim=hidden_dim, t_hidden=t_hidden, out_dim=out_dim,
        slab_width=slab_width)

    slab = pl.pallas_call(
        kernel,
        out_shape=out_shape,
        grid=grid,
        in_specs=in_specs,
        out_specs=out_specs,
        compiler_params=pltpu.CompilerParams(
            dimension_semantics=("parallel",),
            vmem_limit_bytes=32 * 1024 * 1024),
        cost_estimate=cost,
    )(x, w0_eff, b0_eff, *sw, *sb, *tw, *tb)

    ensemble_out = slab[:, off_out:off_out + out_dim]
    aux = {
        "NN_pred": slab[:, 0:1],
        "M_NN_pred": slab[:, 1:2],
        "NN_relation_feat": slab[:, off_rel:off_rel + hidden_dim],
        "ensemble_model_relation_feat": slab[:, off_trel:off_trel + t_hidden],
    }
    return ensemble_out, aux


# ----------------------------------------------------------------------------
# Pure-JAX f32 reference (original, unfolded formulation) for correctness check
# ----------------------------------------------------------------------------
def reference_forward(params, x, lb, ub, *, s_ens, s_rel, t_rel, atten_option):
    def student(p):
        h = 2.0 * (x - lb) / (ub - lb) - 1.0
        feats, a = [], h
        for i in range(len(p["W"]) - 1):
            a = jnp.tanh(a @ p["W"][i] + p["b"][i])
            feats.append(a)
        pred = a @ p["W"][-1] + p["b"][-1]
        return pred, feats

    nn_pred, nn_feats = student(params["model_NN"])
    mn_pred, mn_feats = student(params["model_M_NN"])
    if atten_option:
        aw = params["atten_w"]
        ens = aw * nn_feats[s_ens] + (1.0 - aw) * mn_feats[s_ens]
    else:
        ens = nn_feats[s_ens] + mn_feats[s_ens]
    tW, tb = params["teacher"]["W"], params["teacher"]["b"]
    out = jnp.tanh(ens @ tW[0] + tb[0])
    middle = []
    for i in range(1, len(tW) - 1):
        out = jnp.tanh(out @ tW[i] + tb[i])
        middle.append(out)
    final = out @ tW[-1] + tb[-1]
    return final, nn_pred, mn_pred, nn_feats[s_rel], middle[t_rel]


# ----------------------------------------------------------------------------
# Deterministic parameter initialisation (mimics torch.nn.Linear default init)
# ----------------------------------------------------------------------------
def init_linear(key, d_in, d_out):
    kw, kb = jax.random.split(key)
    bound = 1.0 / math.sqrt(d_in)
    w = jax.random.uniform(kw, (d_in, d_out), jnp.float32, -bound, bound)
    b = jax.random.uniform(kb, (1, d_out), jnp.float32, -bound, bound)
    return w, b


def init_mlp(key, layer_sizes):
    keys = jax.random.split(key, len(layer_sizes) - 1)
    ws, bs = [], []
    for k, d_in, d_out in zip(keys, layer_sizes[:-1], layer_sizes[1:]):
        w, b = init_linear(k, d_in, d_out)
        ws.append(w)
        bs.append(b)
    return {"W": ws, "b": bs}


# ----------------------------------------------------------------------------
# Driver
# ----------------------------------------------------------------------------
if __name__ == "__main__":
    M_and_NN_layers = [2, 32, 32, 32, 1]       # student widths: (x,t) -> rho
    hidden_dim = 32
    in_dim = hidden_dim                        # teacher consumes combined ensemble_feat
    out_dim = 1
    ensemble_middle_layers_count = 4           # teacher: 1 in + 2 middle + 1 out linear
    student_ensemble_layer_num = 1
    student_relation_layer_num = -1
    teacher_relation_layer_num = -1

    lb = jnp.array([[0.0, 0.0]], dtype=jnp.float32)
    ub = jnp.array([[1.0, 3.0]], dtype=jnp.float32)

    key = jax.random.PRNGKey(0)
    k_nn, k_mnn, k_teacher, k_atten, k_x, k_x2 = jax.random.split(key, 6)

    teacher_sizes = ([in_dim] + [hidden_dim] * (ensemble_middle_layers_count - 1)
                     + [out_dim])
    params = {
        "model_NN": init_mlp(k_nn, M_and_NN_layers),
        "model_M_NN": init_mlp(k_mnn, M_and_NN_layers),
        "teacher": init_mlp(k_teacher, teacher_sizes),
        # torch.nn.init.uniform_ on a (hidden_dim,) parameter -> U[0,1)
        "atten_w": jax.random.uniform(k_atten, (1, hidden_dim), jnp.float32),
    }

    n_hid = len(M_and_NN_layers) - 2
    s_ens = student_ensemble_layer_num % n_hid
    s_rel = student_relation_layer_num % n_hid
    t_rel = teacher_relation_layer_num % (ensemble_middle_layers_count - 2)

    # bf16 MXU matmuls (f32 accumulation) vs a pure-f32 reference: use a tolerance
    # with headroom over the worst observed accumulated rounding (~2e-2).
    tol = 5e-2

    def check(x_in, atten_option):
        fwd = jax.jit(functools.partial(
            teacher_forward,
            lb=lb, ub=ub,
            student_ensemble_layer_num=student_ensemble_layer_num,
            student_relation_layer_num=student_relation_layer_num,
            teacher_relation_layer_num=teacher_relation_layer_num,
            atten_option=atten_option))
        ensemble_out, aux = fwd(params, x_in)
        jax.block_until_ready(ensemble_out)

        b = x_in.shape[0]
        assert ensemble_out.shape == (b, out_dim)
        assert aux["NN_pred"].shape == (b, 1)
        assert aux["M_NN_pred"].shape == (b, 1)
        assert aux["NN_relation_feat"].shape == (b, hidden_dim)
        assert aux["ensemble_model_relation_feat"].shape == (b, hidden_dim)

        ref_out, ref_nn_pred, ref_mn_pred, ref_nn_rel, ref_t_rel = reference_forward(
            params, x_in, lb, ub, s_ens=s_ens, s_rel=s_rel, t_rel=t_rel,
            atten_option=atten_option)
        assert float(jnp.max(jnp.abs(ensemble_out - ref_out))) < tol
        assert float(jnp.max(jnp.abs(aux["NN_pred"] - ref_nn_pred))) < tol
        assert float(jnp.max(jnp.abs(aux["M_NN_pred"] - ref_mn_pred))) < tol
        assert float(jnp.max(jnp.abs(aux["NN_relation_feat"] - ref_nn_rel))) < tol
        assert float(jnp.max(jnp.abs(
            aux["ensemble_model_relation_feat"] - ref_t_rel))) < tol

    # 1) small batch, plain-sum combine (module default)
    x_small = jax.random.uniform(k_x, (8, 2), jnp.float32)          # [x, t] columns
    check(x_small, atten_option=False)

    # 2) small batch, attention combine (exercises the diag(aw) fold into tw[0])
    check(x_small, atten_option=True)

    # 3) batch that is NOT a multiple of the tile (grid of 2, partial last block)
    x_big = jax.random.uniform(k_x2, (300, 2), jnp.float32)
    check(x_big, atten_option=False)

    print("KERNEL_OK")
</pallas_src>

<mosaic_0001>
module attributes {stable_mosaic.version = 11 : i64} {
  func.func @_teacher_fused_kernel(%arg0: i32, %arg1: memref<8x2xf32, #tpu.memory_space<vmem>>, %arg2: memref<2x64xf32, #tpu.memory_space<vmem>>, %arg3: memref<1x64xf32, #tpu.memory_space<vmem>>, %arg4: memref<64x64xbf16, #tpu.memory_space<vmem>>, %arg5: memref<64x64xbf16, #tpu.memory_space<vmem>>, %arg6: memref<64x2xbf16, #tpu.memory_space<vmem>>, %arg7: memref<1x64xf32, #tpu.memory_space<vmem>>, %arg8: memref<1x64xf32, #tpu.memory_space<vmem>>, %arg9: memref<1x2xf32, #tpu.memory_space<vmem>>, %arg10: memref<64x32xbf16, #tpu.memory_space<vmem>>, %arg11: memref<32x32xbf16, #tpu.memory_space<vmem>>, %arg12: memref<32x32xbf16, #tpu.memory_space<vmem>>, %arg13: memref<32x1xbf16, #tpu.memory_space<vmem>>, %arg14: memref<1x32xf32, #tpu.memory_space<vmem>>, %arg15: memref<1x32xf32, #tpu.memory_space<vmem>>, %arg16: memref<1x32xf32, #tpu.memory_space<vmem>>, %arg17: memref<1x1xf32, #tpu.memory_space<vmem>>, %arg18: memref<8x128xf32, #tpu.memory_space<vmem>>) attributes {dimension_semantics = [#tpu.dimension_semantics<parallel>], iteration_bounds = array<i64: 1>, scalar_prefetch = 0 : i64, scratch_operands = 0 : i64, tpu.core_type = #tpu.core_type<tc>, window_params = [{transform_indices = @transform_0, window_bounds = array<i64: 8, 2>}, {pipeline_mode = #tpu.pipeline_mode<synchronous>, transform_indices = @transform_1, window_bounds = array<i64: 2, 64>}, {pipeline_mode = #tpu.pipeline_mode<synchronous>, transform_indices = @transform_2, window_bounds = array<i64: 1, 64>}, {pipeline_mode = #tpu.pipeline_mode<synchronous>, transform_indices = @transform_3, window_bounds = array<i64: 64, 64>}, {pipeline_mode = #tpu.pipeline_mode<synchronous>, transform_indices = @transform_4, window_bounds = array<i64: 64, 64>}, {pipeline_mode = #tpu.pipeline_mode<synchronous>, transform_indices = @transform_5, window_bounds = array<i64: 64, 2>}, {pipeline_mode = #tpu.pipeline_mode<synchronous>, transform_indices = @transform_6, window_bounds = array<i64: 1, 64>}, {pipeline_mode = #tpu.pipeline_mode<synchronous>, transform_indices = @transform_7, window_bounds = array<i64: 1, 64>}, {pipeline_mode = #tpu.pipeline_mode<synchronous>, transform_indices = @transform_8, window_bounds = array<i64: 1, 2>}, {pipeline_mode = #tpu.pipeline_mode<synchronous>, transform_indices = @transform_9, window_bounds = array<i64: 64, 32>}, {pipeline_mode = #tpu.pipeline_mode<synchronous>, transform_indices = @transform_10, window_bounds = array<i64: 32, 32>}, {pipeline_mode = #tpu.pipeline_mode<synchronous>, transform_indices = @transform_11, window_bounds = array<i64: 32, 32>}, {pipeline_mode = #tpu.pipeline_mode<synchronous>, transform_indices = @transform_12, window_bounds = array<i64: 32, 1>}, {pipeline_mode = #tpu.pipeline_mode<synchronous>, transform_indices = @transform_13, window_bounds = array<i64: 1, 32>}, {pipeline_mode = #tpu.pipeline_mode<synchronous>, transform_indices = @transform_14, window_bounds = array<i64: 1, 32>}, {pipeline_mode = #tpu.pipeline_mode<synchronous>, transform_indices = @transform_15, window_bounds = array<i64: 1, 32>}, {pipeline_mode = #tpu.pipeline_mode<synchronous>, transform_indices = @transform_16, window_bounds = array<i64: 1, 1>}, {transform_indices = @transform_17, window_bounds = array<i64: 8, 128>}]} {
    %cst = arith.constant 0.000000e+00 : f32
    %0 = vector.broadcast %cst : f32 to vector<8x128xf32>
    %c0 = arith.constant 0 : index
    %c0_0 = arith.constant 0 : index
    %1 = vector.load %arg18[%c0, %c0_0] : memref<8x128xf32, #tpu.memory_space<vmem>>, vector<8x128xf32>
    tpu.vector_store %arg18[%c0, %c0_0], %0 {strides = array<i32>} : memref<8x128xf32, #tpu.memory_space<vmem>>, vector<8x128xf32>,
    %c0_1 = arith.constant 0 : index
    %c0_2 = arith.constant 0 : index
    %2 = vector.load %arg1[%c0_1, %c0_2] : memref<8x2xf32, #tpu.memory_space<vmem>>, vector<8x2xf32>
    %c0_3 = arith.constant 0 : index
    %c0_4 = arith.constant 0 : index
    %3 = vector.load %arg2[%c0_3, %c0_4] : memref<2x64xf32, #tpu.memory_space<vmem>>, vector<2x64xf32>
    %c0_5 = arith.constant 0 : index
    %c0_6 = arith.constant 0 : index
    %4 = vector.load %arg3[%c0_5, %c0_6] : memref<1x64xf32, #tpu.memory_space<vmem>>, vector<1x64xf32>
    %5 = vector.extract_strided_slice %2 {offsets = [0, 0], sizes = [8, 1], strides = [1, 1]} : vector<8x2xf32> to vector<8x1xf32>
    %6 = vector.extract_strided_slice %3 {offsets = [0, 0], sizes = [1, 64], strides = [1, 1]} : vector<2x64xf32> to vector<1x64xf32>
    %7 = vector.broadcast %5 : vector<8x1xf32> to vector<8x64xf32>
    %8 = vector.broadcast %6 : vector<1x64xf32> to vector<8x64xf32>
    %9 = arith.mulf %7, %8 : vector<8x64xf32>
    %10 = vector.broadcast %4 : vector<1x64xf32> to vector<8x64xf32>
    %11 = arith.addf %10, %9 : vector<8x64xf32>
    %12 = vector.extract_strided_slice %2 {offsets = [0, 1], sizes = [8, 1], strides = [1, 1]} : vector<8x2xf32> to vector<8x1xf32>
    %13 = vector.extract_strided_slice %3 {offsets = [1, 0], sizes = [1, 64], strides = [1, 1]} : vector<2x64xf32> to vector<1x64xf32>
    %14 = vector.broadcast %12 : vector<8x1xf32> to vector<8x64xf32>
    %15 = vector.broadcast %13 : vector<1x64xf32> to vector<8x64xf32>
    %16 = arith.mulf %14, %15 : vector<8x64xf32>
    %17 = arith.addf %11, %16 : vector<8x64xf32>
    %18 = math.tanh %17 : vector<8x64xf32>
    %19 = arith.truncf %18 : vector<8x64xf32> to vector<8x64xbf16>
    %c0_7 = arith.constant 0 : index
    %c0_8 = arith.constant 0 : index
    %20 = vector.load %arg4[%c0_7, %c0_8] : memref<64x64xbf16, #tpu.memory_space<vmem>>, vector<64x64xbf16>
    %cst_9 = arith.constant dense<0.000000e+00> : vector<8x64xf32>
    %21 = tpu.matmul %19, %20, %cst_9 {dimension_numbers = #tpu.dot_dimension_numbers<[1], [0], [0], [1], [0, 0, 1, 1], [], []>} : vector<8x64xbf16>, vector<64x64xbf16>, vector<8x64xf32> -> vector<8x64xf32>
    %c0_10 = arith.constant 0 : index
    %c0_11 = arith.constant 0 : index
    %22 = vector.load %arg7[%c0_10, %c0_11] : memref<1x64xf32, #tpu.memory_space<vmem>>, vector<1x64xf32>
    %23 = vector.broadcast %22 : vector<1x64xf32> to vector<8x64xf32>
    %24 = arith.addf %21, %23 : vector<8x64xf32>
    %25 = math.tanh %24 : vector<8x64xf32>
    %26 = arith.truncf %25 : vector<8x64xf32> to vector<8x64xbf16>
    %c0_12 = arith.constant 0 : index
    %c0_13 = arith.constant 0 : index
    %27 = vector.load %arg5[%c0_12, %c0_13] : memref<64x64xbf16, #tpu.memory_space<vmem>>, vector<64x64xbf16>
    %cst_14 = arith.constant dense<0.000000e+00> : vector<8x64xf32>
    %28 = tpu.matmul %26, %27, %cst_14 {dimension_numbers = #tpu.dot_dimension_numbers<[1], [0], [0], [1], [0, 0, 1, 1], [], []>} : vector<8x64xbf16>, vector<64x64xbf16>, vector<8x64xf32> -> vector<8x64xf32>
    %c0_15 = arith.constant 0 : index
    %c0_16 = arith.constant 0 : index
    %29 = vector.load %arg8[%c0_15, %c0_16] : memref<1x64xf32, #tpu.memory_space<vmem>>, vector<1x64xf32>
    %30 = vector.broadcast %29 : vector<1x64xf32> to vector<8x64xf32>
    %31 = arith.addf %28, %30 : vector<8x64xf32>
    %32 = math.tanh %31 : vector<8x64xf32>
    %33 = vector.extract_strided_slice %32 {offsets = [0, 0], sizes = [8, 32], strides = [1, 1]} : vector<8x64xf32> to vector<8x32xf32>
    %c0_17 = arith.constant 0 : index
    %c2 = arith.constant 2 : index
    %34 = vector.load %arg18[%c0_17, %c2] : memref<8x128xf32, #tpu.memory_space<vmem>>, vector<8x32xf32>
    tpu.vector_store %arg18[%c0_17, %c2], %33 {strides = array<i32>} : memref<8x128xf32, #tpu.memory_space<vmem>>, vector<8x32xf32>,
    %35 = arith.truncf %32 : vector<8x64xf32> to vector<8x64xbf16>
    %c0_18 = arith.constant 0 : index
    %c0_19 = arith.constant 0 : index
    %36 = vector.load %arg6[%c0_18, %c0_19] : memref<64x2xbf16, #tpu.memory_space<vmem>>, vector<64x2xbf16>
    %cst_20 = arith.constant dense<0.000000e+00> : vector<8x2xf32>
    %37 = tpu.matmul %35, %36, %cst_20 {dimension_numbers = #tpu.dot_dimension_numbers<[1], [0], [0], [1], [0, 0, 1, 1], [], []>} : vector<8x64xbf16>, vector<64x2xbf16>, vector<8x2xf32> -> vector<8x2xf32>
    %c0_21 = arith.constant 0 : index
    %c0_22 = arith.constant 0 : index
    %38 = vector.load %arg9[%c0_21, %c0_22] : memref<1x2xf32, #tpu.memory_space<vmem>>, vector<1x2xf32>
    %39 = vector.broadcast %38 : vector<1x2xf32> to vector<8x2xf32>
    %40 = arith.addf %37, %39 : vector<8x2xf32>
    %c0_23 = arith.constant 0 : index
    %c0_24 = arith.constant 0 : index
    %41 = vector.load %arg18[%c0_23, %c0_24] : memref<8x128xf32, #tpu.memory_space<vmem>>, vector<8x2xf32>
    tpu.vector_store %arg18[%c0_23, %c0_24], %40 {strides = array<i32>} : memref<8x128xf32, #tpu.memory_space<vmem>>, vector<8x2xf32>,
    %42 = arith.truncf %25 : vector<8x64xf32> to vector<8x64xbf16>
    %c0_25 = arith.constant 0 : index
    %c0_26 = arith.constant 0 : index
    %43 = vector.load %arg10[%c0_25, %c0_26] : memref<64x32xbf16, #tpu.memory_space<vmem>>, vector<64x32xbf16>
    %cst_27 = arith.constant dense<0.000000e+00> : vector<8x32xf32>
    %44 = tpu.matmul %42, %43, %cst_27 {dimension_numbers = #tpu.dot_dimension_numbers<[1], [0], [0], [1], [0, 0, 1, 1], [], []>} : vector<8x64xbf16>, vector<64x32xbf16>, vector<8x32xf32> -> vector<8x32xf32>
    %c0_28 = arith.constant 0 : index
    %c0_29 = arith.constant 0 : index
    %45 = vector.load %arg14[%c0_28, %c0_29] : memref<1x32xf32, #tpu.memory_space<vmem>>, vector<1x32xf32>
    %46 = vector.broadcast %45 : vector<1x32xf32> to vector<8x32xf32>
    %47 = arith.addf %44, %46 : vector<8x32xf32>
    %48 = math.tanh %47 : vector<8x32xf32>
    %49 = arith.truncf %48 : vector<8x32xf32> to vector<8x32xbf16>
    %c0_30 = arith.constant 0 : index
    %c0_31 = arith.constant 0 : index
    %50 = vector.load %arg11[%c0_30, %c0_31] : memref<32x32xbf16, #tpu.memory_space<vmem>>, vector<32x32xbf16>
    %cst_32 = arith.constant dense<0.000000e+00> : vector<8x32xf32>
    %51 = tpu.matmul %49, %50, %cst_32 {dimension_numbers = #tpu.dot_dimension_numbers<[1], [0], [0], [1], [0, 0, 1, 1], [], []>} : vector<8x32xbf16>, vector<32x32xbf16>, vector<8x32xf32> -> vector<8x32xf32>
    %c0_33 = arith.constant 0 : index
    %c0_34 = arith.constant 0 : index
    %52 = vector.load %arg15[%c0_33, %c0_34] : memref<1x32xf32, #tpu.memory_space<vmem>>, vector<1x32xf32>
    %53 = vector.broadcast %52 : vector<1x32xf32> to vector<8x32xf32>
    %54 = arith.addf %51, %53 : vector<8x32xf32>
    %55 = math.tanh %54 : vector<8x32xf32>
    %56 = arith.truncf %55 : vector<8x32xf32> to vector<8x32xbf16>
    %c0_35 = arith.constant 0 : index
    %c0_36 = arith.constant 0 : index
    %57 = vector.load %arg12[%c0_35, %c0_36] : memref<32x32xbf16, #tpu.memory_space<vmem>>, vector<32x32xbf16>
    %cst_37 = arith.constant dense<0.000000e+00> : vector<8x32xf32>
    %58 = tpu.matmul %56, %57, %cst_37 {dimension_numbers = #tpu.dot_dimension_numbers<[1], [0], [0], [1], [0, 0, 1, 1], [], []>} : vector<8x32xbf16>, vector<32x32xbf16>, vector<8x32xf32> -> vector<8x32xf32>
    %c0_38 = arith.constant 0 : index
    %c0_39 = arith.constant 0 : index
    %59 = vector.load %arg16[%c0_38, %c0_39] : memref<1x32xf32, #tpu.memory_space<vmem>>, vector<1x32xf32>
    %60 = vector.broadcast %59 : vector<1x32xf32> to vector<8x32xf32>
    %61 = arith.addf %58, %60 : vector<8x32xf32>
    %62 = math.tanh %61 : vector<8x32xf32>
    %c0_40 = arith.constant 0 : index
    %c34 = arith.constant 34 : index
    %63 = vector.load %arg18[%c0_40, %c34] : memref<8x128xf32, #tpu.memory_space<vmem>>, vector<8x32xf32>
    tpu.vector_store %arg18[%c0_40, %c34], %62 {strides = array<i32>} : memref<8x128xf32, #tpu.memory_space<vmem>>, vector<8x32xf32>,
    %64 = arith.truncf %62 : vector<8x32xf32> to vector<8x32xbf16>
    %c0_41 = arith.constant 0 : index
    %c0_42 = arith.constant 0 : index
    %65 = vector.load %arg13[%c0_41, %c0_42] : memref<32x1xbf16, #tpu.memory_space<vmem>>, vector<32x1xbf16>
    %cst_43 = arith.constant dense<0.000000e+00> : vector<8x1xf32>
    %66 = tpu.matmul %64, %65, %cst_43 {dimension_numbers = #tpu.dot_dimension_numbers<[1], [0], [0], [1], [0, 0, 1, 1], [], []>} : vector<8x32xbf16>, vector<32x1xbf16>, vector<8x1xf32> -> vector<8x1xf32>
    %c0_44 = arith.constant 0 : index
    %c0_45 = arith.constant 0 : index
    %67 = vector.load %arg17[%c0_44, %c0_45] : memref<1x1xf32, #tpu.memory_space<vmem>>, vector<1x1xf32>
    %68 = vector.broadcast %67 : vector<1x1xf32> to vector<8x1xf32>
    %69 = arith.addf %66, %68 : vector<8x1xf32>
    %c0_46 = arith.constant 0 : index
    %c66 = arith.constant 66 : index
    %70 = vector.load %arg18[%c0_46, %c66] : memref<8x128xf32, #tpu.memory_space<vmem>>, vector<8x1xf32>
    tpu.vector_store %arg18[%c0_46, %c66], %69 {strides = array<i32>} : memref<8x128xf32, #tpu.memory_space<vmem>>, vector<8x1xf32>,
    return
  }
  func.func @transform_0(%arg0: i32) -> (i32, i32) {
    %c0_i32 = arith.constant 0 : i32
    %c0_i32_0 = arith.constant 0 : i32
    return %arg0, %c0_i32 : i32, i32
  }
  func.func @transform_1(%arg0: i32) -> (i32, i32) {
    %c0_i32 = arith.constant 0 : i32
    %c0_i32_0 = arith.constant 0 : i32
    %c0_i32_1 = arith.constant 0 : i32
    return %c0_i32, %c0_i32_0 : i32, i32
  }
  func.func @transform_2(%arg0: i32) -> (i32, i32) {
    %c0_i32 = arith.constant 0 : i32
    %c0_i32_0 = arith.constant 0 : i32
    %c0_i32_1 = arith.constant 0 : i32
    return %c0_i32, %c0_i32_0 : i32, i32
  }
  func.func @transform_3(%arg0: i32) -> (i32, i32) {
    %c0_i32 = arith.constant 0 : i32
    %c0_i32_0 = arith.constant 0 : i32
    %c0_i32_1 = arith.constant 0 : i32
    return %c0_i32, %c0_i32_0 : i32, i32
  }
  func.func @transform_4(%arg0: i32) -> (i32, i32) {
    %c0_i32 = arith.constant 0 : i32
    %c0_i32_0 = arith.constant 0 : i32
    %c0_i32_1 = arith.constant 0 : i32
    return %c0_i32, %c0_i32_0 : i32, i32
  }
  func.func @transform_5(%arg0: i32) -> (i32, i32) {
    %c0_i32 = arith.constant 0 : i32
    %c0_i32_0 = arith.constant 0 : i32
    %c0_i32_1 = arith.constant 0 : i32
    return %c0_i32, %c0_i32_0 : i32, i32
  }
  func.func @transform_6(%arg0: i32) -> (i32, i32) {
    %c0_i32 = arith.constant 0 : i32
    %c0_i32_0 = arith.constant 0 : i32
    %c0_i32_1 = arith.constant 0 : i32
    return %c0_i32, %c0_i32_0 : i32, i32
  }
  func.func @transform_7(%arg0: i32) -> (i32, i32) {
    %c0_i32 = arith.constant 0 : i32
    %c0_i32_0 = arith.constant 0 : i32
    %c0_i32_1 = arith.constant 0 : i32
    return %c0_i32, %c0_i32_0 : i32, i32
  }
  func.func @transform_8(%arg0: i32) -> (i32, i32) {
    %c0_i32 = arith.constant 0 : i32
    %c0_i32_0 = arith.constant 0 : i32
    %c0_i32_1 = arith.constant 0 : i32
    return %c0_i32, %c0_i32_0 : i32, i32
  }
  func.func @transform_9(%arg0: i32) -> (i32, i32) {
    %c0_i32 = arith.constant 0 : i32
    %c0_i32_0 = arith.constant 0 : i32
    %c0_i32_1 = arith.constant 0 : i32
    return %c0_i32, %c0_i32_0 : i32, i32
  }
  func.func @transform_10(%arg0: i32) -> (i32, i32) {
    %c0_i32 = arith.constant 0 : i32
    %c0_i32_0 = arith.constant 0 : i32
    %c0_i32_1 = arith.constant 0 : i32
    return %c0_i32, %c0_i32_0 : i32, i32
  }
  func.func @transform_11(%arg0: i32) -> (i32, i32) {
    %c0_i32 = arith.constant 0 : i32
    %c0_i32_0 = arith.constant 0 : i32
    %c0_i32_1 = arith.constant 0 : i32
    return %c0_i32, %c0_i32_0 : i32, i32
  }
  func.func @transform_12(%arg0: i32) -> (i32, i32) {
    %c0_i32 = arith.constant 0 : i32
    %c0_i32_0 = arith.constant 0 : i32
    %c0_i32_1 = arith.constant 0 : i32
    return %c0_i32, %c0_i32_0 : i32, i32
  }
  func.func @transform_13(%arg0: i32) -> (i32, i32) {
    %c0_i32 = arith.constant 0 : i32
    %c0_i32_0 = arith.constant 0 : i32
    %c0_i32_1 = arith.constant 0 : i32
    return %c0_i32, %c0_i32_0 : i32, i32
  }
  func.func @transform_14(%arg0: i32) -> (i32, i32) {
    %c0_i32 = arith.constant 0 : i32
    %c0_i32_0 = arith.constant 0 : i32
    %c0_i32_1 = arith.constant 0 : i32
    return %c0_i32, %c0_i32_0 : i32, i32
  }
  func.func @transform_15(%arg0: i32) -> (i32, i32) {
    %c0_i32 = arith.constant 0 : i32
    %c0_i32_0 = arith.constant 0 : i32
    %c0_i32_1 = arith.constant 0 : i32
    return %c0_i32, %c0_i32_0 : i32, i32
  }
  func.func @transform_16(%arg0: i32) -> (i32, i32) {
    %c0_i32 = arith.constant 0 : i32
    %c0_i32_0 = arith.constant 0 : i32
    %c0_i32_1 = arith.constant 0 : i32
    return %c0_i32, %c0_i32_0 : i32, i32
  }
  func.func @transform_17(%arg0: i32) -> (i32, i32) {
    %c0_i32 = arith.constant 0 : i32
    %c0_i32_0 = arith.constant 0 : i32
    return %arg0, %c0_i32 : i32, i32
  }
}

</mosaic_0001>

<llo_original>
// kernel: teacher_forward.1
$region0: #{teacher_forward.1}
  #allocation0 [shape = 'u32[]', space=smem, size = 0x4, offset = 0x4, fixed_abs, tag = 'smem constant byte address 0x4 - core index']
  #allocation1 [shape = 'u32[144,128]{1,0:T(1,128)}', space=vmem, size = 0x12000, scoped, tag = 'internal scratch']
  #allocation2 [shape = 'f32[1,1]{1,0:T(1,128)S(1)}', space=vmem, size = 0x200, scoped, tag = 'scoped memory for teacher_forward.1']
  %s0 = inlined_call_operand.vmem [shape: f32[8,2], index: 0, kind: input, shape index: {}]
  %s1 = inlined_call_operand.vmem [shape: f32[2,64], index: 1, kind: input, shape index: {}]
  %s2 = inlined_call_operand.vmem [shape: f32[1,64], index: 2, kind: input, shape index: {}]
  %s3 = inlined_call_operand.vmem [shape: bf16[64,64], index: 3, kind: input, shape index: {}]
  %s4 = inlined_call_operand.vmem [shape: bf16[64,64], index: 4, kind: input, shape index: {}]
  %s5 = inlined_call_operand.vmem [shape: bf16[64,2], index: 5, kind: input, shape index: {}]
  %s6 = inlined_call_operand.vmem [shape: f32[1,64], index: 6, kind: input, shape index: {}]
  %s7 = inlined_call_operand.vmem [shape: f32[1,64], index: 7, kind: input, shape index: {}]
  %s8 = inlined_call_operand.vmem [shape: f32[1,2], index: 8, kind: input, shape index: {}]
  %s9 = inlined_call_operand.vmem [shape: bf16[64,32], index: 9, kind: input, shape index: {}]
  %s10 = inlined_call_operand.vmem [shape: bf16[32,32], index: 10, kind: input, shape index: {}]
  %s11 = inlined_call_operand.vmem [shape: bf16[32,32], index: 11, kind: input, shape index: {}]
  %s12 = inlined_call_operand.vmem [shape: bf16[32,1], index: 12, kind: input, shape index: {}]
  %s13 = inlined_call_operand.vmem [shape: f32[1,32], index: 13, kind: input, shape index: {}]
  %s14 = inlined_call_operand.vmem [shape: f32[1,32], index: 14, kind: input, shape index: {}]
  %s15 = inlined_call_operand.vmem [shape: f32[1,32], index: 15, kind: input, shape index: {}]
  %s16 = inlined_call_operand.<no memory space> [shape: f32[1,1], index: 16, kind: input, shape index: {}]
  %s17 = inlined_call_operand.vmem [shape: f32[8,128], index: 17, kind: output, shape index: {}]
  %s18 = sld [smem:[#allocation0]]
  $region78: #{teacher_forward.1} parent=0
    _
  %s20 = ssub.s32 1, %s18
  %s21 = scalar_select 0, %s20, %s18
  %v22 = vstv %s16
  %23 = vst [vmem:[#allocation2] sm:$0x1] %v22
  // Predicated region
  $region2: #{teacher_forward.1} parent=0 // pred_check
    _
  $region3: #{teacher_forward.1} parent=0 // pred_check_branch
    %25 = sbr.rel (0) target = $region5
  $region4: #{teacher_forward.1} parent=0 // pred_region
    _
  $region5: #{teacher_forward.1} parent=0 // pred_fallthru
    _
  // Predicated region
  $region6: #{teacher_forward.1} parent=0 // pred_check
    _
  $region7: #{teacher_forward.1} parent=0 // pred_check_branch
    %27 = sbr.rel (0) target = $region9
  $region8: #{teacher_forward.1} parent=0 // pred_region
    _
  $region9: #{teacher_forward.1} parent=0 // pred_fallthru
    _
  // Predicated region
  $region10: #{teacher_forward.1} parent=0 // pred_check
    _
  $region11: #{teacher_forward.1} parent=0 // pred_check_branch
    %29 = sbr.rel (0) target = $region13
  $region12: #{teacher_forward.1} parent=0 // pred_region
    _
  $region13: #{teacher_forward.1} parent=0 // pred_fallthru
    _
  // Predicated region
  $region14: #{teacher_forward.1} parent=0 // pred_check
    _
  $region15: #{teacher_forward.1} parent=0 // pred_check_branch
    %31 = sbr.rel (0) target = $region17
  $region16: #{teacher_forward.1} parent=0 // pred_region
    _
  $region17: #{teacher_forward.1} parent=0 // pred_fallthru
    _
  // Predicated region
  $region18: #{teacher_forward.1} parent=0 // pred_check
    _
  $region19: #{teacher_forward.1} parent=0 // pred_check_branch
    %33 = sbr.rel (0) target = $region21
  $region20: #{teacher_forward.1} parent=0 // pred_region
    _
  $region21: #{teacher_forward.1} parent=0 // pred_fallthru
    _
  // Predicated region
  $region22: #{teacher_forward.1} parent=0 // pred_check
    _
  $region23: #{teacher_forward.1} parent=0 // pred_check_branch
    %35 = sbr.rel (0) target = $region25
  $region24: #{teacher_forward.1} parent=0 // pred_region
    _
  $region25: #{teacher_forward.1} parent=0 // pred_fallthru
    _
  // Predicated region
  $region26: #{teacher_forward.1} parent=0 // pred_check
    _
  $region27: #{teacher_forward.1} parent=0 // pred_check_branch
    %37 = sbr.rel (0) target = $region29
  $region28: #{teacher_forward.1} parent=0 // pred_region
    _
  $region29: #{teacher_forward.1} parent=0 // pred_fallthru
    _
  // Predicated region
  $region30: #{teacher_forward.1} parent=0 // pred_check
    _
  $region31: #{teacher_forward.1} parent=0 // pred_check_branch
    %39 = sbr.rel (0) target = $region33
  $region32: #{teacher_forward.1} parent=0 // pred_region
    _
  $region33: #{teacher_forward.1} parent=0 // pred_fallthru
    _
  // Predicated region
  $region34: #{teacher_forward.1} parent=0 // pred_check
    _
  $region35: #{teacher_forward.1} parent=0 // pred_check_branch
    %41 = sbr.rel (0) target = $region37
  $region36: #{teacher_forward.1} parent=0 // pred_region
    _
  $region37: #{teacher_forward.1} parent=0 // pred_fallthru
    _
  // Predicated region
  $region38: #{teacher_forward.1} parent=0 // pred_check
    _
  $region39: #{teacher_forward.1} parent=0 // pred_check_branch
    %43 = sbr.rel (0) target = $region41
  $region40: #{teacher_forward.1} parent=0 // pred_region
    _
  $region41: #{teacher_forward.1} parent=0 // pred_fallthru
    _
  // Predicated region
  $region42: #{teacher_forward.1} parent=0 // pred_check
    _
  $region43: #{teacher_forward.1} parent=0 // pred_check_branch
    %45 = sbr.rel (0) target = $region45
  $region44: #{teacher_forward.1} parent=0 // pred_region
    _
  $region45: #{teacher_forward.1} parent=0 // pred_fallthru
    _
  // Predicated region
  $region46: #{teacher_forward.1} parent=0 // pred_check
    _
  $region47: #{teacher_forward.1} parent=0 // pred_check_branch
    %47 = sbr.rel (0) target = $region49
  $region48: #{teacher_forward.1} parent=0 // pred_region
    _
  $region49: #{teacher_forward.1} parent=0 // pred_fallthru
    _
  // Predicated region
  $region50: #{teacher_forward.1} parent=0 // pred_check
    _
  $region51: #{teacher_forward.1} parent=0 // pred_check_branch
    %49 = sbr.rel (0) target = $region53
  $region52: #{teacher_forward.1} parent=0 // pred_region
    _
  $region53: #{teacher_forward.1} parent=0 // pred_fallthru
    _
  // Predicated region
  $region54: #{teacher_forward.1} parent=0 // pred_check
    _
  $region55: #{teacher_forward.1} parent=0 // pred_check_branch
    %51 = sbr.rel (0) target = $region57
  $region56: #{teacher_forward.1} parent=0 // pred_region
    _
  $region57: #{teacher_forward.1} parent=0 // pred_fallthru
    _
  // Predicated region
  $region58: #{teacher_forward.1} parent=0 // pred_check
    _
  $region59: #{teacher_forward.1} parent=0 // pred_check_branch
    %53 = sbr.rel (0) target = $region61
  $region60: #{teacher_forward.1} parent=0 // pred_region
    _
  $region61: #{teacher_forward.1} parent=0 // pred_fallthru
    _
  // Predicated region
  $region62: #{teacher_forward.1} parent=0 // pred_check
    _
  $region63: #{teacher_forward.1} parent=0 // pred_check_branch
    %55 = sbr.rel (0) target = $region65
  $region64: #{teacher_forward.1} parent=0 // pred_region
    _
  $region65: #{teacher_forward.1} parent=0 // pred_fallthru
    _
  // Predicated region
  $region66: #{teacher_forward.1} parent=0 // pred_check
    _
  $region67: #{teacher_forward.1} parent=0 // pred_check_branch
    %57 = sbr.rel (0) target = $region69
  $region68: #{teacher_forward.1} parent=0 // pred_region
    _
  $region69: #{teacher_forward.1} parent=0 // pred_fallthru
    _
  %59 = vst [vmem:[%s17] sm:$0xff] 0.0
  %v60 = vld [vmem:[%s0] sm:$0xff]
  %v61 = vld [vmem:[%s1] sm:$0x3]
  %v62 = vld [vmem:[%s2] sm:$0x1]
  %64 = vset.pattern.permute.xlu0 0
  %65 = vperm.xlu0 %64, %v60
  %v66 = vpop.permute.xlu0 %65
  %v68 = vlaneseq
  %v69 = vshrl.u32 %v68, 7
  %v70 = vsub.s32 0, %v69
  %v71 = vrot.slane %v61, %v70
  %v72 = vmul.f32 %v66, %v71
  %v74 = vlaneseq
  %v75 = vshrl.u32 %v74, 7
  %v76 = vsub.s32 0, %v75
  %v77 = vrot.slane %v62, %v76
  %v79 = vadd.f32 %v77, %v72
  %80 = vset.pattern.permute.xlu0 1
  %81 = vperm.xlu0 %80, %v60
  %v82 = vpop.permute.xlu0 %81
  %v84 = vlaneseq
  %v85 = vshrl.u32 %v84, 7
  %v86 = vsub.s32 1, %v85
  %v87 = vrot.slane %v61, %v86
  %v88 = vmul.f32 %v82, %v87
  %v89 = vadd.f32 %v79, %v88
  %v90 = vtanh.pop %v89
  %v91 = vpack.c.bf16 %v90, %v90
  %v92 = vld [vmem:[%s3] sm:$0xf]
  %v93 = vld [vmem:[%s3 + $0x4] sm:$0xf]
  %v94 = vld [vmem:[%s3 + $0x8] sm:$0xf]
  %v95 = vld [vmem:[%s3 + $0xc] sm:$0xf]
  %v96 = vld [vmem:[%s3 + $0x10] sm:$0xf]
  %v97 = vld [vmem:[%s3 + $0x14] sm:$0xf]
  %v98 = vld [vmem:[%s3 + $0x18] sm:$0xf]
  %v99 = vld [vmem:[%s3 + $0x1c] sm:$0xf]
  %v100 = vld [vmem:[%s6] sm:$0x1]
  %v102 = vlaneseq
  %v103 = vshrl.u32 %v102, 7
  %v104 = vsub.s32 0, %v103
  %v105 = vrot.slane %v100, %v104
  %v115 = vunpack.c.l.b16 %v92
  %v116 = vunpack.c.l.b16 %v93
  %v117 = vunpack.c.l.b16 %v94
  %v118 = vunpack.c.l.b16 %v95
  %v119 = vunpack.c.l.b16 %v96
  %v120 = vunpack.c.l.b16 %v97
  %v121 = vunpack.c.l.b16 %v98
  %v122 = vunpack.c.l.b16 %v99
  %v123 = vpack.c.b16 %v116, %v115
  %v124 = vpack.c.b16 %v118, %v117
  %v125 = vpack.c.b16 %v120, %v119
  %v126 = vpack.c.b16 %v122, %v121
  %vm131 = vcmask 523264
  %v133 = vsel %vm131, %v91, 0
  %135 = vmatprep.subr.bf16.mxu0 0
  %136 = vmatpush1.bf16.msra.mxu0 %v123
  %137 = vmatprep.subr.bf16.mxu0 0
  %138 = vmatpush1.bf16.msra.mxu0 %v124
  %139 = vmatprep.subr.bf16.mxu0 0
  %140 = vmatpush1.bf16.msra.mxu0 %v125
  %141 = vmatprep.subr.bf16.mxu0 0
  %142 = vmatpush1.bf16.msra.mxu0 %v126
  %143 = vmatprep.subr.bf16.mxu0 0
  %144 = vmatpush1.bf16.msra.mxu0 0
  %145 = vmatprep.subr.bf16.mxu0 0
  %146 = vmatpush1.bf16.msra.mxu0 0
  %147 = vmatprep.subr.bf16.mxu0 0
  %148 = vmatpush1.bf16.msra.mxu0 0
  %149 = vmatprep.subr.bf16.mxu0 0
  %150 = vmatpush1.bf16.msra.mxu0 0
  %151 = vmatprep.subr.bf16.mxu0 0
  %152 = vmatpush1.bf16.msra.mxu0 0
  %153 = vmatprep.subr.bf16.mxu0 0
  %154 = vmatpush1.bf16.msra.mxu0 0
  %155 = vmatprep.subr.bf16.mxu0 0
  %156 = vmatpush1.bf16.msra.mxu0 0
  %157 = vmatprep.subr.bf16.mxu0 0
  %158 = vmatpush1.bf16.msra.mxu0 0
  %159 = vmatprep.subr.bf16.mxu0 0
  %160 = vmatpush1.bf16.msra.mxu0 0
  %161 = vmatprep.subr.bf16.mxu0 0
  %162 = vmatpush1.bf16.msra.mxu0 0
  %163 = vmatprep.subr.bf16.mxu0 0
  %164 = vmatpush1.bf16.msra.mxu0 0
  %165 = vmatprep.subr.bf16.mxu0 0
  %166 = vmatpush1.bf16.msra.mxu0 0
  %167 = vmatprep.mubr.bf16.mxu0 0
  %168 = vmatmul.mubr.bf16.gmra.mrb[0].mxu0 %v133
  %v169 = vpop.f32.mrb[0].mxu0
  %v170 = vadd.f32 %v105, %v169
  %v171 = vpop.f32.mrb[0].mxu0
  %v172 = vpop.f32.mrb[0].mxu0
  %v173 = vpop.f32.mrb[0].mxu0
  %174 = vdwg.mxu0
  %v175 = vtanh.pop %v170
  %v176 = vpack.c.bf16 %v175, %v175
  %v177 = vld [vmem:[%s4] sm:$0xf]
  %v178 = vld [vmem:[%s4 + $0x4] sm:$0xf]
  %v179 = vld [vmem:[%s4 + $0x8] sm:$0xf]
  %v180 = vld [vmem:[%s4 + $0xc] sm:$0xf]
  %v181 = vld [vmem:[%s4 + $0x10] sm:$0xf]
  %v182 = vld [vmem:[%s4 + $0x14] sm:$0xf]
  %v183 = vld [vmem:[%s4 + $0x18] sm:$0xf]
  %v184 = vld [vmem:[%s4 + $0x1c] sm:$0xf]
  %v185 = vld [vmem:[%s7] sm:$0x1]
  %v187 = vlaneseq
  %v188 = vshrl.u32 %v187, 7
  %v189 = vsub.s32 0, %v188
  %v190 = vrot.slane %v185, %v189
  %v200 = vunpack.c.l.b16 %v177
  %v201 = vunpack.c.l.b16 %v178
  %v202 = vunpack.c.l.b16 %v179
  %v203 = vunpack.c.l.b16 %v180
  %v204 = vunpack.c.l.b16 %v181
  %v205 = vunpack.c.l.b16 %v182
  %v206 = vunpack.c.l.b16 %v183
  %v207 = vunpack.c.l.b16 %v184
  %v208 = vpack.c.b16 %v201, %v200
  %v209 = vpack.c.b16 %v203, %v202
  %v210 = vpack.c.b16 %v205, %v204
  %v211 = vpack.c.b16 %v207, %v206
  %v217 = vsel %vm131, %v176, 0
  %219 = vmatprep.subr.bf16.mxu0 0
  %220 = vmatpush1.bf16.msra.mxu0 %v208
  %221 = vmatprep.subr.bf16.mxu0 0
  %222 = vmatpush1.bf16.msra.mxu0 %v209
  %223 = vmatprep.subr.bf16.mxu0 0
  %224 = vmatpush1.bf16.msra.mxu0 %v210
  %225 = vmatprep.subr.bf16.mxu0 0
  %226 = vmatpush1.bf16.msra.mxu0 %v211
  %227 = vmatprep.subr.bf16.mxu0 0
  %228 = vmatpush1.bf16.msra.mxu0 0
  %229 = vmatprep.subr.bf16.mxu0 0
  %230 = vmatpush1.bf16.msra.mxu0 0
  %231 = vmatprep.subr.bf16.mxu0 0
  %232 = vmatpush1.bf16.msra.mxu0 0
  %233 = vmatprep.subr.bf16.mxu0 0
  %234 = vmatpush1.bf16.msra.mxu0 0
  %235 = vmatprep.subr.bf16.mxu0 0
  %236 = vmatpush1.bf16.msra.mxu0 0
  %237 = vmatprep.subr.bf16.mxu0 0
  %238 = vmatpush1.bf16.msra.mxu0 0
  %239 = vmatprep.subr.bf16.mxu0 0
  %240 = vmatpush1.bf16.msra.mxu0 0
  %241 = vmatprep.subr.bf16.mxu0 0
  %242 = vmatpush1.bf16.msra.mxu0 0
  %243 = vmatprep.subr.bf16.mxu0 0
  %244 = vmatpush1.bf16.msra.mxu0 0
  %245 = vmatprep.subr.bf16.mxu0 0
  %246 = vmatpush1.bf16.msra.mxu0 0
  %247 = vmatprep.subr.bf16.mxu0 0
  %248 = vmatpush1.bf16.msra.mxu0 0
  %249 = vmatprep.subr.bf16.mxu0 0
  %250 = vmatpush1.bf16.msra.mxu0 0
  %251 = vmatprep.mubr.bf16.mxu0 0
  %252 = vmatmul.mubr.bf16.gmra.mrb[0].mxu0 %v217
  %v253 = vpop.f32.mrb[0].mxu0
  %v254 = vadd.f32 %v190, %v253
  %v255 = vpop.f32.mrb[0].mxu0
  %v256 = vpop.f32.mrb[0].mxu0
  %v257 = vpop.f32.mrb[0].mxu0
  %258 = vdwg.mxu0
  %v259 = vtanh.pop %v254
  %261 = vrot.lane.b32.xlu0 %v259, 2
  %v262 = vpop.permute.xlu0 %261
  %vm264 = vcmask 277520
  %265 = vst.msk [vmem:[%s17] sm:$0xff] %vm264, %v262
  %v266 = vpack.c.bf16 %v259, %v259
  %v267 = vld [vmem:[%s5] sm:$0xf]
  %v268 = vld [vmem:[%s5 + $0x4] sm:$0xf]
  %v269 = vld [vmem:[%s5 + $0x8] sm:$0xf]
  %v270 = vld [vmem:[%s5 + $0xc] sm:$0xf]
  %v271 = vld [vmem:[%s5 + $0x10] sm:$0xf]
  %v272 = vld [vmem:[%s5 + $0x14] sm:$0xf]
  %v273 = vld [vmem:[%s5 + $0x18] sm:$0xf]
  %v274 = vld [vmem:[%s5 + $0x1c] sm:$0xf]
  %v275 = vld [vmem:[%s8] sm:$0x1]
  %v277 = vlaneseq
  %v278 = vshrl.u32 %v277, 7
  %v279 = vsub.s32 0, %v278
  %v280 = vrot.slane %v275, %v279
  %v290 = vunpack.c.l.b16 %v267
  %v291 = vunpack.c.l.b16 %v268
  %v292 = vunpack.c.l.b16 %v269
  %v293 = vunpack.c.l.b16 %v270
  %v294 = vunpack.c.l.b16 %v271
  %v295 = vunpack.c.l.b16 %v272
  %v296 = vunpack.c.l.b16 %v273
  %v297 = vunpack.c.l.b16 %v274
  %v298 = vpack.c.b16 %v291, %v290
  %v299 = vpack.c.b16 %v293, %v292
  %v300 = vpack.c.b16 %v295, %v294
  %v301 = vpack.c.b16 %v297, %v296
  %v307 = vsel %vm131, %v266, 0
  %309 = vmatprep.subr.bf16.mxu0 0
  %310 = vmatpush1.bf16.msra.mxu0 %v298
  %311 = vmatprep.subr.bf16.mxu0 0
  %312 = vmatpush1.bf16.msra.mxu0 %v299
  %313 = vmatprep.subr.bf16.mxu0 0
  %314 = vmatpush1.bf16.msra.mxu0 %v300
  %315 = vmatprep.subr.bf16.mxu0 0
  %316 = vmatpush1.bf16.msra.mxu0 %v301
  %317 = vmatprep.subr.bf16.mxu0 0
  %318 = vmatpush1.bf16.msra.mxu0 0
  %319 = vmatprep.subr.bf16.mxu0 0
  %320 = vmatpush1.bf16.msra.mxu0 0
  %321 = vmatprep.subr.bf16.mxu0 0
  %322 = vmatpush1.bf16.msra.mxu0 0
  %323 = vmatprep.subr.bf16.mxu0 0
  %324 = vmatpush1.bf16.msra.mxu0 0
  %325 = vmatprep.subr.bf16.mxu0 0
  %326 = vmatpush1.bf16.msra.mxu0 0
  %327 = vmatprep.subr.bf16.mxu0 0
  %328 = vmatpush1.bf16.msra.mxu0 0
  %329 = vmatprep.subr.bf16.mxu0 0
  %330 = vmatpush1.bf16.msra.mxu0 0
  %331 = vmatprep.subr.bf16.mxu0 0
  %332 = vmatpush1.bf16.msra.mxu0 0
  %333 = vmatprep.subr.bf16.mxu0 0
  %334 = vmatpush1.bf16.msra.mxu0 0
  %335 = vmatprep.subr.bf16.mxu0 0
  %336 = vmatpush1.bf16.msra.mxu0 0
  %337 = vmatprep.subr.bf16.mxu0 0
  %338 = vmatpush1.bf16.msra.mxu0 0
  %339 = vmatprep.subr.bf16.mxu0 0
  %340 = vmatpush1.bf16.msra.mxu0 0
  %341 = vmatprep.mubr.bf16.mxu0 0
  %342 = vmatmul.mubr.bf16.gmra.mrb[0].mxu0 %v307
  %v343 = vpop.f32.mrb[0].mxu0
  %v344 = vadd.f32 %v280, %v343
  %v345 = vpop.f32.mrb[0].mxu0
  %v346 = vpop.f32.mrb[0].mxu0
  %v347 = vpop.f32.mrb[0].mxu0
  %348 = vdwg.mxu0
  %vm349 = vcmask 15360
  %350 = vst.msk [vmem:[%s17] sm:$0xff] %vm349, %v344
  %v351 = vld [vmem:[%s9] sm:$0xf]
  %v352 = vld [vmem:[%s9 + $0x4] sm:$0xf]
  %v353 = vld [vmem:[%s9 + $0x8] sm:$0xf]
  %v354 = vld [vmem:[%s9 + $0xc] sm:$0xf]
  %v355 = vld [vmem:[%s9 + $0x10] sm:$0xf]
  %v356 = vld [vmem:[%s9 + $0x14] sm:$0xf]
  %v357 = vld [vmem:[%s9 + $0x18] sm:$0xf]
  %v358 = vld [vmem:[%s9 + $0x1c] sm:$0xf]
  %v359 = vld [vmem:[%s13] sm:$0x1]
  %v361 = vlaneseq
  %v362 = vshrl.u32 %v361, 7
  %v363 = vsub.s32 0, %v362
  %v364 = vrot.slane %v359, %v363
  %v374 = vunpack.c.l.b16 %v351
  %v375 = vunpack.c.l.b16 %v352
  %v376 = vunpack.c.l.b16 %v353
  %v377 = vunpack.c.l.b16 %v354
  %v378 = vunpack.c.l.b16 %v355
  %v379 = vunpack.c.l.b16 %v356
  %v380 = vunpack.c.l.b16 %v357
  %v381 = vunpack.c.l.b16 %v358
  %v382 = vpack.c.b16 %v375, %v374
  %v383 = vpack.c.b16 %v377, %v376
  %v384 = vpack.c.b16 %v379, %v378
  %v385 = vpack.c.b16 %v381, %v380
  %390 = vmatprep.subr.bf16.mxu0 0
  %391 = vmatpush1.bf16.msra.mxu0 %v382
  %392 = vmatprep.subr.bf16.mxu0 0
  %393 = vmatpush1.bf16.msra.mxu0 %v383
  %394 = vmatprep.subr.bf16.mxu0 0
  %395 = vmatpush1.bf16.msra.mxu0 %v384
  %396 = vmatprep.subr.bf16.mxu0 0
  %397 = vmatpush1.bf16.msra.mxu0 %v385
  %398 = vmatprep.subr.bf16.mxu0 0
  %399 = vmatpush1.bf16.msra.mxu0 0
  %400 = vmatprep.subr.bf16.mxu0 0
  %401 = vmatpush1.bf16.msra.mxu0 0
  %402 = vmatprep.subr.bf16.mxu0 0
  %403 = vmatpush1.bf16.msra.mxu0 0
  %404 = vmatprep.subr.bf16.mxu0 0
  %405 = vmatpush1.bf16.msra.mxu0 0
  %406 = vmatprep.subr.bf16.mxu0 0
  %407 = vmatpush1.bf16.msra.mxu0 0
  %408 = vmatprep.subr.bf16.mxu0 0
  %409 = vmatpush1.bf16.msra.mxu0 0
  %410 = vmatprep.subr.bf16.mxu0 0
  %411 = vmatpush1.bf16.msra.mxu0 0
  %412 = vmatprep.subr.bf16.mxu0 0
  %413 = vmatpush1.bf16.msra.mxu0 0
  %414 = vmatprep.subr.bf16.mxu0 0
  %415 = vmatpush1.bf16.msra.mxu0 0
  %416 = vmatprep.subr.bf16.mxu0 0
  %417 = vmatpush1.bf16.msra.mxu0 0
  %418 = vmatprep.subr.bf16.mxu0 0
  %419 = vmatpush1.bf16.msra.mxu0 0
  %420 = vmatprep.subr.bf16.mxu0 0
  %421 = vmatpush1.bf16.msra.mxu0 0
  %422 = vmatprep.mubr.bf16.mxu0 0
  %423 = vmatmul.mubr.bf16.gmra.mrb[0].mxu0 %v217
  %v424 = vpop.f32.mrb[0].mxu0
  %v425 = vadd.f32 %v364, %v424
  %v426 = vpop.f32.mrb[0].mxu0
  %v427 = vpop.f32.mrb[0].mxu0
  %v428 = vpop.f32.mrb[0].mxu0
  %429 = vdwg.mxu0
  %v430 = vtanh.pop %v425
  %v431 = vpack.c.bf16 %v430, %v430
  %v432 = vld [vmem:[%s10] sm:$0xf]
  %v433 = vld [vmem:[%s10 + $0x4] sm:$0xf]
  %v434 = vld [vmem:[%s10 + $0x8] sm:$0xf]
  %v435 = vld [vmem:[%s10 + $0xc] sm:$0xf]
  %v436 = vld [vmem:[%s14] sm:$0x1]
  %v438 = vlaneseq
  %v439 = vshrl.u32 %v438, 7
  %v440 = vsub.s32 0, %v439
  %v441 = vrot.slane %v436, %v440
  %v447 = vunpack.c.l.b16 %v432
  %v448 = vunpack.c.l.b16 %v433
  %v449 = vunpack.c.l.b16 %v434
  %v450 = vunpack.c.l.b16 %v435
  %v451 = vpack.c.b16 %v448, %v447
  %v452 = vpack.c.b16 %v450, %v449
  %vm455 = vcmask 261120
  %v457 = vsel %vm455, %v431, 0
  %459 = vmatprep.subr.bf16.mxu0 0
  %460 = vmatpush1.bf16.msra.mxu0 %v451
  %461 = vmatprep.subr.bf16.mxu0 0
  %462 = vmatpush1.bf16.msra.mxu0 %v452
  %463 = vmatprep.subr.bf16.mxu0 0
  %464 = vmatpush1.bf16.msra.mxu0 0
  %465 = vmatprep.subr.bf16.mxu0 0
  %466 = vmatpush1.bf16.msra.mxu0 0
  %467 = vmatprep.subr.bf16.mxu0 0
  %468 = vmatpush1.bf16.msra.mxu0 0
  %469 = vmatprep.subr.bf16.mxu0 0
  %470 = vmatpush1.bf16.msra.mxu0 0
  %471 = vmatprep.subr.bf16.mxu0 0
  %472 = vmatpush1.bf16.msra.mxu0 0
  %473 = vmatprep.subr.bf16.mxu0 0
  %474 = vmatpush1.bf16.msra.mxu0 0
  %475 = vmatprep.subr.bf16.mxu0 0
  %476 = vmatpush1.bf16.msra.mxu0 0
  %477 = vmatprep.subr.bf16.mxu0 0
  %478 = vmatpush1.bf16.msra.mxu0 0
  %479 = vmatprep.subr.bf16.mxu0 0
  %480 = vmatpush1.bf16.msra.mxu0 0
  %481 = vmatprep.subr.bf16.mxu0 0
  %482 = vmatpush1.bf16.msra.mxu0 0
  %483 = vmatprep.subr.bf16.mxu0 0
  %484 = vmatpush1.bf16.msra.mxu0 0
  %485 = vmatprep.subr.bf16.mxu0 0
  %486 = vmatpush1.bf16.msra.mxu0 0
  %487 = vmatprep.subr.bf16.mxu0 0
  %488 = vmatpush1.bf16.msra.mxu0 0
  %489 = vmatprep.subr.bf16.mxu0 0
  %490 = vmatpush1.bf16.msra.mxu0 0
  %491 = vmatprep.mubr.bf16.mxu0 0
  %492 = vmatmul.mubr.bf16.gmra.mrb[0].mxu0 %v457
  %v493 = vpop.f32.mrb[0].mxu0
  %v494 = vadd.f32 %v441, %v493
  %v495 = vpop.f32.mrb[0].mxu0
  %v496 = vpop.f32.mrb[0].mxu0
  %v497 = vpop.f32.mrb[0].mxu0
  %498 = vdwg.mxu0
  %v499 = vtanh.pop %v494
  %v500 = vpack.c.bf16 %v499, %v499
  %v501 = vld [vmem:[%s11] sm:$0xf]
  %v502 = vld [vmem:[%s11 + $0x4] sm:$0xf]
  %v503 = vld [vmem:[%s11 + $0x8] sm:$0xf]
  %v504 = vld [vmem:[%s11 + $0xc] sm:$0xf]
  %v505 = vld [vmem:[%s15] sm:$0x1]
  %v507 = vlaneseq
  %v508 = vshrl.u32 %v507, 7
  %v509 = vsub.s32 0, %v508
  %v510 = vrot.slane %v505, %v509
  %v516 = vunpack.c.l.b16 %v501
  %v517 = vunpack.c.l.b16 %v502
  %v518 = vunpack.c.l.b16 %v503
  %v519 = vunpack.c.l.b16 %v504
  %v520 = vpack.c.b16 %v517, %v516
  %v521 = vpack.c.b16 %v519, %v518
  %v525 = vsel %vm455, %v500, 0
  %527 = vmatprep.subr.bf16.mxu0 0
  %528 = vmatpush1.bf16.msra.mxu0 %v520
  %529 = vmatprep.subr.bf16.mxu0 0
  %530 = vmatpush1.bf16.msra.mxu0 %v521
  %531 = vmatprep.subr.bf16.mxu0 0
  %532 = vmatpush1.bf16.msra.mxu0 0
  %533 = vmatprep.subr.bf16.mxu0 0
  %534 = vmatpush1.bf16.msra.mxu0 0
  %535 = vmatprep.subr.bf16.mxu0 0
  %536 = vmatpush1.bf16.msra.mxu0 0
  %537 = vmatprep.subr.bf16.mxu0 0
  %538 = vmatpush1.bf16.msra.mxu0 0
  %539 = vmatprep.subr.bf16.mxu0 0
  %540 = vmatpush1.bf16.msra.mxu0 0
  %541 = vmatprep.subr.bf16.mxu0 0
  %542 = vmatpush1.bf16.msra.mxu0 0
  %543 = vmatprep.subr.bf16.mxu0 0
  %544 = vmatpush1.bf16.msra.mxu0 0
  %545 = vmatprep.subr.bf16.mxu0 0
  %546 = vmatpush1.bf16.msra.mxu0 0
  %547 = vmatprep.subr.bf16.mxu0 0
  %548 = vmatpush1.bf16.msra.mxu0 0
  %549 = vmatprep.subr.bf16.mxu0 0
  %550 = vmatpush1.bf16.msra.mxu0 0
  %551 = vmatprep.subr.bf16.mxu0 0
  %552 = vmatpush1.bf16.msra.mxu0 0
  %553 = vmatprep.subr.bf16.mxu0 0
  %554 = vmatpush1.bf16.msra.mxu0 0
  %555 = vmatprep.subr.bf16.mxu0 0
  %556 = vmatpush1.bf16.msra.mxu0 0
  %557 = vmatprep.subr.bf16.mxu0 0
  %558 = vmatpush1.bf16.msra.mxu0 0
  %559 = vmatprep.mubr.bf16.mxu0 0
  %560 = vmatmul.mubr.bf16.gmra.mrb[0].mxu0 %v525
  %v561 = vpop.f32.mrb[0].mxu0
  %v562 = vadd.f32 %v510, %v561
  %v563 = vpop.f32.mrb[0].mxu0
  %v564 = vpop.f32.mrb[0].mxu0
  %v565 = vpop.f32.mrb[0].mxu0
  %566 = vdwg.mxu0
  %v567 = vtanh.pop %v562
  %569 = vrot.lane.b32.xlu0 %v567, 34
  %v570 = vpop.permute.xlu0 %569
  %vm572 = vcmask 539920
  %573 = vst.msk [vmem:[%s17] sm:$0xff] %vm572, %v570
  %v574 = vpack.c.bf16 %v567, %v567
  %v575 = vld [vmem:[%s12] sm:$0xf]
  %v576 = vld [vmem:[%s12 + $0x4] sm:$0xf]
  %v577 = vld [vmem:[%s12 + $0x8] sm:$0xf]
  %v578 = vld [vmem:[%s12 + $0xc] sm:$0xf]
  %v579 = vld [vmem:[#allocation2] sm:$0x1]
  %v581 = vlaneseq
  %v582 = vshrl.u32 %v581, 7
  %v583 = vsub.s32 0, %v582
  %v584 = vrot.slane %v579, %v583
  %v590 = vunpack.c.l.b16 %v575
  %v591 = vunpack.c.l.b16 %v576
  %v592 = vunpack.c.l.b16 %v577
  %v593 = vunpack.c.l.b16 %v578
  %v594 = vpack.c.b16 %v591, %v590
  %v595 = vpack.c.b16 %v593, %v592
  %v599 = vsel %vm455, %v574, 0
  %601 = vmatprep.subr.bf16.mxu0 0
  %602 = vmatpush1.bf16.msra.mxu0 %v594
  %603 = vmatprep.subr.bf16.mxu0 0
  %604 = vmatpush1.bf16.msra.mxu0 %v595
  %605 = vmatprep.subr.bf16.mxu0 0
  %606 = vmatpush1.bf16.msra.mxu0 0
  %607 = vmatprep.subr.bf16.mxu0 0
  %608 = vmatpush1.bf16.msra.mxu0 0
  %609 = vmatprep.subr.bf16.mxu0 0
  %610 = vmatpush1.bf16.msra.mxu0 0
  %611 = vmatprep.subr.bf16.mxu0 0
  %612 = vmatpush1.bf16.msra.mxu0 0
  %613 = vmatprep.subr.bf16.mxu0 0
  %614 = vmatpush1.bf16.msra.mxu0 0
  %615 = vmatprep.subr.bf16.mxu0 0
  %616 = vmatpush1.bf16.msra.mxu0 0
  %617 = vmatprep.subr.bf16.mxu0 0
  %618 = vmatpush1.bf16.msra.mxu0 0
  %619 = vmatprep.subr.bf16.mxu0 0
  %620 = vmatpush1.bf16.msra.mxu0 0
  %621 = vmatprep.subr.bf16.mxu0 0
  %622 = vmatpush1.bf16.msra.mxu0 0
  %623 = vmatprep.subr.bf16.mxu0 0
  %624 = vmatpush1.bf16.msra.mxu0 0
  %625 = vmatprep.subr.bf16.mxu0 0
  %626 = vmatpush1.bf16.msra.mxu0 0
  %627 = vmatprep.subr.bf16.mxu0 0
  %628 = vmatpush1.bf16.msra.mxu0 0
  %629 = vmatprep.subr.bf16.mxu0 0
  %630 = vmatpush1.bf16.msra.mxu0 0
  %631 = vmatprep.subr.bf16.mxu0 0
  %632 = vmatpush1.bf16.msra.mxu0 0
  %633 = vmatprep.mubr.bf16.mxu0 0
  %634 = vmatmul.mubr.bf16.gmra.mrb[0].mxu0 %v599
  %v635 = vpop.f32.mrb[0].mxu0
  %v636 = vadd.f32 %v584, %v635
  %v637 = vpop.f32.mrb[0].mxu0
  %v638 = vpop.f32.mrb[0].mxu0
  %v639 = vpop.f32.mrb[0].mxu0
  %640 = vdwg.mxu0
  %642 = vrot.lane.b32.xlu0 %v636, 66
  %v643 = vpop.permute.xlu0 %642
  %vm645 = vcmask 548368
  %646 = vst.msk [vmem:[%s17] sm:$0xff] %vm645, %v643
  // Predicated region
  $region70: #{teacher_forward.1} parent=0 // pred_check
    _
  $region71: #{teacher_forward.1} parent=0 // pred_check_branch
    %648 = sbr.rel (0) target = $region73
  $region72: #{teacher_forward.1} parent=0 // pred_region
    _
  $region73: #{teacher_forward.1} parent=0 // pred_fallthru
    _
  // Predicated region
  $region74: #{teacher_forward.1} parent=0 // pred_check
    _
  $region75: #{teacher_forward.1} parent=0 // pred_check_branch
    %650 = sbr.rel (0) target = $region77
  $region76: #{teacher_forward.1} parent=0 // pred_region
    _
  $region77: #{teacher_forward.1} parent=0 // pred_fallthru
    _

</llo_original>
